<compile_context>
chip_gen: v6e
topology: v6e:2x2x1
jax: 0.10.0
libtpu: 0.0.40
codegen_flags: <defaults>
</compile_context>

<pallas_src>
import functools

import jax
import jax.numpy as jnp
from jax.experimental import pallas as pl
from jax.experimental.pallas import tpu as pltpu


_VMEM_BUDGET = 16 << 20      # pipeline-buffer + temp budget (safe on v5e/v6e/v7x)
_VMEM_LIMIT = 32 << 20       # scoped-VMEM limit handed to Mosaic
_SEG_BYTES_MAX = 2 << 20     # max resident segment-matrix size (per buffer)
_MIN_GRID_STEPS = 4          # keep >=2 steps for v7x megacore / DMA overlap


def _round_up(a, b):
    return ((a + b - 1) // b) * b


def _make_mxu_kernel(mode, inv_w, h):
    """Lane-dense path: x block is (G, H*W); reduction via MXU segment matmul."""
    def kernel(x_ref, seg_ref, out_ref):
        xf = x_ref[...].astype(jnp.float32)                       # (G, H*W)
        seg = seg_ref[...]                                        # (H*W, H) 0/1 f32
        s1 = jnp.dot(xf, seg, preferred_element_type=jnp.float32,
                     precision=jax.lax.Precision.HIGHEST)         # exact row sums
        mean_x = s1 * inv_w                                       # (G, H)
        if mode == 0:
            out_ref[...] = mean_x.astype(out_ref.dtype)
            return
        s2 = jnp.dot(xf * xf, seg, preferred_element_type=jnp.float32,
                     precision=jax.lax.Precision.HIGHEST)
        mean_x2 = s2 * inv_w
        std_x = jnp.sqrt(jnp.maximum(mean_x2 - mean_x * mean_x, 0.0))
        if mode == 1:
            out_ref[...] = std_x.astype(out_ref.dtype)
        else:                                   # mode 2: fused [mean | std]
            out_ref[:, :h] = mean_x.astype(out_ref.dtype)
            out_ref[:, h:] = std_x.astype(out_ref.dtype)
    return kernel


def _make_reduce_kernel(mode, inv_w, h):
    """Fallback path (W % 128 == 0 or oversized segment matrix): lane reduce."""
    def kernel(x_ref, out_ref):
        xf = x_ref[...].astype(jnp.float32)                       # (G, H, W)
        mean_x = jnp.sum(xf, axis=-1) * inv_w                     # (G, H)
        if mode == 0:
            out_ref[...] = mean_x.astype(out_ref.dtype)
            return
        mean_x2 = jnp.sum(xf * xf, axis=-1) * inv_w
        std_x = jnp.sqrt(jnp.maximum(mean_x2 - mean_x * mean_x, 0.0))
        if mode == 1:
            out_ref[...] = std_x.astype(out_ref.dtype)
        else:
            out_ref[:, :h] = mean_x.astype(out_ref.dtype)
            out_ref[:, h:] = std_x.astype(out_ref.dtype)
    return kernel


def _choose_group_tile(n_groups, h, w, dtype, out_width, lane_dense):
    """Groups (rows) per grid step, sized against padded, double-buffered VMEM."""
    itemsize = jnp.dtype(dtype).itemsize
    sub = max(8, 32 // itemsize)                 # 8 (f32) / 16 (bf16) / 32 (i8)
    if n_groups <= sub:
        return n_groups                          # single full-extent block
    if lane_dense:
        in_pad = _round_up(h * w, 128) * itemsize
        tmp_pad = 2 * _round_up(h * w, 128) * 4  # f32 upcast + square temps
    else:
        in_pad = _round_up(h, sub) * _round_up(w, 128) * itemsize
        tmp_pad = 2 * _round_up(h, 8) * _round_up(w, 128) * 4
    out_pad = _round_up(out_width, 128) * itemsize
    per_group = 2 * (in_pad + out_pad) + tmp_pad  # 2x: double-buffered pipeline
    g = max(1, _VMEM_BUDGET // per_group)
    # Keep several grid steps so both v7x TensorCores get work and the DMA
    # pipeline has something to overlap with.
    g_cap = _round_up(max(1, (n_groups + _MIN_GRID_STEPS - 1) // _MIN_GRID_STEPS),
                      sub)
    g = min(g, g_cap)
    g = max(sub, (g // sub) * sub)               # sublane-packed tile
    if g >= n_groups:
        return n_groups
    return g


@functools.partial(jax.jit, static_argnums=(1,))
def stat_pool_layer(x, mode):
    """StatPoolLayer.forward: (B, C*H) for mode 0/1, (B, 2*C*H) for mode 2."""
    if mode not in (0, 1, 2):
        raise ValueError("mode must be 0, 1 or 2")
    if not jnp.issubdtype(x.dtype, jnp.floating):
        raise TypeError(f"stat_pool_layer expects floating input, got {x.dtype}")

    B, C, H, W = x.shape
    N = B * C
    itemsize = jnp.dtype(x.dtype).itemsize
    out_width = 2 * H if mode == 2 else H
    inv_w = 1.0 / W

    # Lane-dense MXU path unless W is already lane-aligned or the segment
    # matrix would be too large to keep resident in VMEM.
    seg_bytes = _round_up(H * W, 8) * _round_up(H, 128) * 4
    lane_dense = (W % 128 != 0) and (seg_bytes <= _SEG_BYTES_MAX)

    G = _choose_group_tile(N, H, W, x.dtype, out_width, lane_dense)
    grid = (pl.cdiv(N, G),)

    out_shape = jax.ShapeDtypeStruct((N, out_width), x.dtype)
    out_specs = pl.BlockSpec((G, out_width), lambda i: (i, 0))

    cost = pl.CostEstimate(
        flops=(3 if mode else 1) * N * H * W,
        transcendentals=0 if mode == 0 else N * H,
        bytes_accessed=N * H * W * itemsize + N * out_width * itemsize,
    )
    compiler_params = pltpu.CompilerParams(
        dimension_semantics=("parallel",),
        vmem_limit_bytes=_VMEM_LIMIT,
    )

    if lane_dense:
        x2 = x.reshape(N, H * W)
        # Static 0/1 segment matrix: seg[p, h] = 1 iff p // W == h.
        seg = (jax.lax.broadcasted_iota(jnp.int32, (H * W, H), 0) // W ==
               jax.lax.broadcasted_iota(jnp.int32, (H * W, H), 1)
               ).astype(jnp.float32)
        out = pl.pallas_call(
            _make_mxu_kernel(mode, inv_w, H),
            out_shape=out_shape,
            grid_spec=pltpu.PrefetchScalarGridSpec(
                num_scalar_prefetch=0,
                grid=grid,
                in_specs=[pl.BlockSpec((G, H * W), lambda i: (i, 0)),
                          pl.BlockSpec((H * W, H), lambda i: (0, 0))],
                out_specs=out_specs,
            ),
            compiler_params=compiler_params,
            cost_estimate=cost,
        )(x2, seg)
    else:
        x3 = x.reshape(N, H, W)
        out = pl.pallas_call(
            _make_reduce_kernel(mode, inv_w, H),
            out_shape=out_shape,
            grid_spec=pltpu.PrefetchScalarGridSpec(
                num_scalar_prefetch=0,
                grid=grid,
                in_specs=[pl.BlockSpec((G, H, W), lambda i: (i, 0, 0))],
                out_specs=out_specs,
            ),
            compiler_params=compiler_params,
            cost_estimate=cost,
        )(x3)

    return out.reshape(B, -1)          # == torch.flatten(out, 1)


def _reference(x, mode):
    mean_x = jnp.mean(x, axis=3)
    mean_x2 = jnp.mean(x * x, axis=3)
    std_x = jnp.sqrt(jnp.maximum(mean_x2 - mean_x ** 2, 0.0))
    if mode == 0:
        out = mean_x
    elif mode == 1:
        out = std_x
    else:
        out = jnp.concatenate([mean_x, std_x], axis=-1)
    return out.reshape(x.shape[0], -1)


if __name__ == "__main__":
    key = jax.random.PRNGKey(0)
    B, C, H, W = 2, 4, 16, 16
    x = jax.random.normal(key, (B, C, H, W), dtype=jnp.float32)

    ok = True
    for mode in (0, 1, 2):
        out = jax.block_until_ready(stat_pool_layer(x, mode))
        ref = _reference(x, mode)
        if out.shape != ref.shape or not jnp.allclose(out, ref,
                                                      atol=1e-5, rtol=1e-5):
            ok = False
            print(f"mode {mode} mismatch: shape {out.shape} vs {ref.shape}, "
                  f"max err {float(jnp.max(jnp.abs(out - ref)))}")

    # Exercise the lane-aligned (W % 128 == 0) fallback path as well.
    x_wide = jax.random.normal(jax.random.PRNGKey(0), (2, 3, 8, 128),
                               dtype=jnp.float32)
    out_w = jax.block_until_ready(stat_pool_layer(x_wide, 2))
    ref_w = _reference(x_wide, 2)
    if out_w.shape != ref_w.shape or not jnp.allclose(out_w, ref_w,
                                                      atol=1e-5, rtol=1e-5):
        ok = False
        print(f"fallback path mismatch: "
              f"max err {float(jnp.max(jnp.abs(out_w - ref_w)))}")

    if ok:
        print("KERNEL_OK")
</pallas_src>

<mosaic_0001>
module attributes {stable_mosaic.version = 11 : i64} {
  func.func @kernel(%arg0: i32, %arg1: memref<8x256xf32, #tpu.memory_space<vmem>>, %arg2: memref<256x16xf32, #tpu.memory_space<vmem>>, %arg3: memref<8x16xf32, #tpu.memory_space<vmem>>) attributes {dimension_semantics = [#tpu.dimension_semantics<parallel>], iteration_bounds = array<i64: 1>, scalar_prefetch = 0 : i64, scratch_operands = 0 : i64, tpu.core_type = #tpu.core_type<tc>, window_params = [{transform_indices = @transform_0, window_bounds = array<i64: 8, 256>}, {pipeline_mode = #tpu.pipeline_mode<synchronous>, transform_indices = @transform_1, window_bounds = array<i64: 256, 16>}, {transform_indices = @transform_2, window_bounds = array<i64: 8, 16>}]} {
    %c0 = arith.constant 0 : index
    %c0_0 = arith.constant 0 : index
    %0 = vector.load %arg1[%c0, %c0_0] : memref<8x256xf32, #tpu.memory_space<vmem>>, vector<8x256xf32>
    %c0_1 = arith.constant 0 : index
    %c0_2 = arith.constant 0 : index
    %1 = vector.load %arg2[%c0_1, %c0_2] : memref<256x16xf32, #tpu.memory_space<vmem>>, vector<256x16xf32>
    %cst = arith.constant dense<0.000000e+00> : vector<8x16xf32>
    %2 = tpu.matmul %0, %1, %cst {dimension_numbers = #tpu.dot_dimension_numbers<[1], [0], [0], [1], [0, 0, 1, 1], [], []>, precision = #tpu.contract_precision<fp32>} : vector<8x256xf32>, vector<256x16xf32>, vector<8x16xf32> -> vector<8x16xf32>
    %cst_3 = arith.constant 6.250000e-02 : f32
    %3 = vector.broadcast %cst_3 : f32 to vector<8x16xf32>
    %4 = arith.mulf %2, %3 : vector<8x16xf32>
    %c0_4 = arith.constant 0 : index
    %c0_5 = arith.constant 0 : index
    %5 = vector.load %arg3[%c0_4, %c0_5] : memref<8x16xf32, #tpu.memory_space<vmem>>, vector<8x16xf32>
    tpu.vector_store %arg3[%c0_4, %c0_5], %4 {strides = array<i32>} : memref<8x16xf32, #tpu.memory_space<vmem>>, vector<8x16xf32>,
    return
  }
  func.func @transform_0(%arg0: i32) -> (i32, i32) {
    %c0_i32 = arith.constant 0 : i32
    %c0_i32_0 = arith.constant 0 : i32
    return %arg0, %c0_i32 : i32, i32
  }
  func.func @transform_1(%arg0: i32) -> (i32, i32) {
    %c0_i32 = arith.constant 0 : i32
    %c0_i32_0 = arith.constant 0 : i32
    %c0_i32_1 = arith.constant 0 : i32
    return %c0_i32, %c0_i32_0 : i32, i32
  }
  func.func @transform_2(%arg0: i32) -> (i32, i32) {
    %c0_i32 = arith.constant 0 : i32
    %c0_i32_0 = arith.constant 0 : i32
    return %arg0, %c0_i32 : i32, i32
  }
}

</mosaic_0001>

<llo_original>
// kernel: stat_pool_layer.1
$region0: #{stat_pool_layer.1}
  #allocation0 [shape = 'u32[]', space=smem, size = 0x4, offset = 0x4, fixed_abs, tag = 'smem constant byte address 0x4 - core index']
  #allocation1 [shape = 'u32[144,128]{1,0:T(1,128)}', space=vmem, size = 0x12000, scoped, tag = 'internal scratch']
  %s0 = inlined_call_operand.vmem [shape: f32[8,256], index: 0, kind: input, shape index: {}]
  %s1 = inlined_call_operand.vmem [shape: f32[256,16], index: 1, kind: input, shape index: {}]
  %s2 = inlined_call_operand.vmem [shape: f32[8,16], index: 2, kind: output, shape index: {}]
  %s3 = sld [smem:[#allocation0]]
  $region18: #{stat_pool_layer.1} parent=0
    _
  %s5 = ssub.s32 1, %s3
  %s6 = scalar_select 0, %s5, %s3
  // Predicated region
  $region2: #{stat_pool_layer.1} parent=0 // pred_check
    _
  $region3: #{stat_pool_layer.1} parent=0 // pred_check_branch
    %8 = sbr.rel (0) target = $region5
  $region4: #{stat_pool_layer.1} parent=0 // pred_region
    _
  $region5: #{stat_pool_layer.1} parent=0 // pred_fallthru
    _
  // Predicated region
  $region6: #{stat_pool_layer.1} parent=0 // pred_check
    _
  $region7: #{stat_pool_layer.1} parent=0 // pred_check_branch
    %10 = sbr.rel (0) target = $region9
  $region8: #{stat_pool_layer.1} parent=0 // pred_region
    _
  $region9: #{stat_pool_layer.1} parent=0 // pred_fallthru
    _
  %v11 = vld [vmem:[%s0] sm:$0xff]
  %v12 = vld [vmem:[%s0 + $0x8] sm:$0xff]
  %v13 = vld [vmem:[%s1] sm:$0xff]
  %v14 = vld [vmem:[%s1 + $0x8] sm:$0xff]
  %v15 = vld [vmem:[%s1 + $0x10] sm:$0xff]
  %v16 = vld [vmem:[%s1 + $0x18] sm:$0xff]
  %v17 = vld [vmem:[%s1 + $0x20] sm:$0xff]
  %v18 = vld [vmem:[%s1 + $0x28] sm:$0xff]
  %v19 = vld [vmem:[%s1 + $0x30] sm:$0xff]
  %v20 = vld [vmem:[%s1 + $0x38] sm:$0xff]
  %v21 = vld [vmem:[%s1 + $0x40] sm:$0xff]
  %v22 = vld [vmem:[%s1 + $0x48] sm:$0xff]
  %v23 = vld [vmem:[%s1 + $0x50] sm:$0xff]
  %v24 = vld [vmem:[%s1 + $0x58] sm:$0xff]
  %v25 = vld [vmem:[%s1 + $0x60] sm:$0xff]
  %v26 = vld [vmem:[%s1 + $0x68] sm:$0xff]
  %v27 = vld [vmem:[%s1 + $0x70] sm:$0xff]
  %v28 = vld [vmem:[%s1 + $0x78] sm:$0xff]
  %v29 = vld [vmem:[%s1 + $0x80] sm:$0xff]
  %v30 = vld [vmem:[%s1 + $0x88] sm:$0xff]
  %v31 = vld [vmem:[%s1 + $0x90] sm:$0xff]
  %v32 = vld [vmem:[%s1 + $0x98] sm:$0xff]
  %v33 = vld [vmem:[%s1 + $0xa0] sm:$0xff]
  %v34 = vld [vmem:[%s1 + $0xa8] sm:$0xff]
  %v35 = vld [vmem:[%s1 + $0xb0] sm:$0xff]
  %v36 = vld [vmem:[%s1 + $0xb8] sm:$0xff]
  %v37 = vld [vmem:[%s1 + $0xc0] sm:$0xff]
  %v38 = vld [vmem:[%s1 + $0xc8] sm:$0xff]
  %v39 = vld [vmem:[%s1 + $0xd0] sm:$0xff]
  %v40 = vld [vmem:[%s1 + $0xd8] sm:$0xff]
  %v41 = vld [vmem:[%s1 + $0xe0] sm:$0xff]
  %v42 = vld [vmem:[%s1 + $0xe8] sm:$0xff]
  %v43 = vld [vmem:[%s1 + $0xf0] sm:$0xff]
  %v44 = vld [vmem:[%s1 + $0xf8] sm:$0xff]
  %45 = vmatprep.subr.mxu0 0.0
  %v46 = vand.u32 %v28, 4294901760
  %47 = vmatpush1.msra.mxu0 %v46
  %48 = vmatprep.subr.mxu0 0.0
  %v49 = vand.u32 %v27, 4294901760
  %50 = vmatpush1.msra.mxu0 %v49
  %51 = vmatprep.subr.mxu0 0.0
  %v52 = vand.u32 %v26, 4294901760
  %53 = vmatpush1.msra.mxu0 %v52
  %54 = vmatprep.subr.mxu0 0.0
  %v55 = vand.u32 %v25, 4294901760
  %56 = vmatpush1.msra.mxu0 %v55
  %57 = vmatprep.subr.mxu0 0.0
  %v58 = vand.u32 %v24, 4294901760
  %59 = vmatpush1.msra.mxu0 %v58
  %60 = vmatprep.subr.mxu0 0.0
  %v61 = vand.u32 %v23, 4294901760
  %62 = vmatpush1.msra.mxu0 %v61
  %63 = vmatprep.subr.mxu0 0.0
  %v64 = vand.u32 %v22, 4294901760
  %65 = vmatpush1.msra.mxu0 %v64
  %66 = vmatprep.subr.mxu0 0.0
  %v67 = vand.u32 %v21, 4294901760
  %68 = vmatpush1.msra.mxu0 %v67
  %69 = vmatprep.subr.mxu0 0.0
  %v70 = vand.u32 %v20, 4294901760
  %71 = vmatpush1.msra.mxu0 %v70
  %72 = vmatprep.subr.mxu0 0.0
  %v73 = vand.u32 %v19, 4294901760
  %74 = vmatpush1.msra.mxu0 %v73
  %75 = vmatprep.subr.mxu0 0.0
  %v76 = vand.u32 %v18, 4294901760
  %77 = vmatpush1.msra.mxu0 %v76
  %78 = vmatprep.subr.mxu0 0.0
  %v79 = vand.u32 %v17, 4294901760
  %80 = vmatpush1.msra.mxu0 %v79
  %81 = vmatprep.subr.mxu0 0.0
  %v82 = vand.u32 %v16, 4294901760
  %83 = vmatpush1.msra.mxu0 %v82
  %84 = vmatprep.subr.mxu0 0.0
  %v85 = vand.u32 %v15, 4294901760
  %86 = vmatpush1.msra.mxu0 %v85
  %87 = vmatprep.subr.mxu0 0.0
  %v88 = vand.u32 %v14, 4294901760
  %89 = vmatpush1.msra.mxu0 %v88
  %90 = vmatprep.subr.mxu0 0.0
  %v91 = vand.u32 %v13, 4294901760
  %92 = vmatpush1.msra.mxu0 %v91
  %93 = vmatprep.subr.mxu0 0.0
  %v94 = vand.u32 %v44, 4294901760
  %95 = vmatpush2.msra.mxu0 %v94
  %96 = vmatprep.subr.mxu0 0.0
  %v97 = vand.u32 %v43, 4294901760
  %98 = vmatpush2.msra.mxu0 %v97
  %99 = vmatprep.subr.mxu0 0.0
  %v100 = vand.u32 %v42, 4294901760
  %101 = vmatpush2.msra.mxu0 %v100
  %102 = vmatprep.subr.mxu0 0.0
  %v103 = vand.u32 %v41, 4294901760
  %104 = vmatpush2.msra.mxu0 %v103
  %105 = vmatprep.subr.mxu0 0.0
  %v106 = vand.u32 %v40, 4294901760
  %107 = vmatpush2.msra.mxu0 %v106
  %108 = vmatprep.subr.mxu0 0.0
  %v109 = vand.u32 %v39, 4294901760
  %110 = vmatpush2.msra.mxu0 %v109
  %111 = vmatprep.subr.mxu0 0.0
  %v112 = vand.u32 %v38, 4294901760
  %113 = vmatpush2.msra.mxu0 %v112
  %114 = vmatprep.subr.mxu0 0.0
  %v115 = vand.u32 %v37, 4294901760
  %116 = vmatpush2.msra.mxu0 %v115
  %117 = vmatprep.subr.mxu0 0.0
  %v118 = vand.u32 %v36, 4294901760
  %119 = vmatpush2.msra.mxu0 %v118
  %120 = vmatprep.subr.mxu0 0.0
  %v121 = vand.u32 %v35, 4294901760
  %122 = vmatpush2.msra.mxu0 %v121
  %123 = vmatprep.subr.mxu0 0.0
  %v124 = vand.u32 %v34, 4294901760
  %125 = vmatpush2.msra.mxu0 %v124
  %126 = vmatprep.subr.mxu0 0.0
  %v127 = vand.u32 %v33, 4294901760
  %128 = vmatpush2.msra.mxu0 %v127
  %129 = vmatprep.subr.mxu0 0.0
  %v130 = vand.u32 %v32, 4294901760
  %131 = vmatpush2.msra.mxu0 %v130
  %132 = vmatprep.subr.mxu0 0.0
  %v133 = vand.u32 %v31, 4294901760
  %134 = vmatpush2.msra.mxu0 %v133
  %135 = vmatprep.subr.mxu0 0.0
  %v136 = vand.u32 %v30, 4294901760
  %137 = vmatpush2.msra.mxu0 %v136
  %138 = vmatprep.subr.mxu0 0.0
  %v139 = vand.u32 %v29, 4294901760
  %140 = vmatpush2.msra.mxu0 %v139
  %v141 = vand.u32 %v12, 4294901760
  %v142 = vsub.f32 %v12, %v141
  %v143 = vand.u32 %v142, 4294901760
  %v144 = vsub.f32 %v142, %v143
  %v145 = vand.u32 %v144, 4294901760
  %146 = vmatprep.mubr.f32.mxu0 %v145
  %v147 = vand.u32 %v11, 4294901760
  %v148 = vsub.f32 %v11, %v147
  %v149 = vand.u32 %v148, 4294901760
  %v150 = vsub.f32 %v148, %v149
  %v151 = vand.u32 %v150, 4294901760
  %152 = vmatmul.mubr.f32.gmra.mxu0 %v151
  %v153 = vpop.f32.mrf.mxu0
  %v154 = vadd.f32 0.0, %v153
  %v155 = vpop.f32.mrf.mxu0
  %156 = vdwg.mxu0
  %157 = vmatprep.subr.mxu0 0.0
  %v158 = vand.u32 %v28, 4294901760
  %v159 = vsub.f32 %v28, %v158
  %v160 = vand.u32 %v159, 4294901760
  %v161 = vsub.f32 %v159, %v160
  %v162 = vand.u32 %v161, 4294901760
  %163 = vmatpush1.msra.mxu0 %v162
  %164 = vmatprep.subr.mxu0 0.0
  %v165 = vand.u32 %v27, 4294901760
  %v166 = vsub.f32 %v27, %v165
  %v167 = vand.u32 %v166, 4294901760
  %v168 = vsub.f32 %v166, %v167
  %v169 = vand.u32 %v168, 4294901760
  %170 = vmatpush1.msra.mxu0 %v169
  %171 = vmatprep.subr.mxu0 0.0
  %v172 = vand.u32 %v26, 4294901760
  %v173 = vsub.f32 %v26, %v172
  %v174 = vand.u32 %v173, 4294901760
  %v175 = vsub.f32 %v173, %v174
  %v176 = vand.u32 %v175, 4294901760
  %177 = vmatpush1.msra.mxu0 %v176
  %178 = vmatprep.subr.mxu0 0.0
  %v179 = vand.u32 %v25, 4294901760
  %v180 = vsub.f32 %v25, %v179
  %v181 = vand.u32 %v180, 4294901760
  %v182 = vsub.f32 %v180, %v181
  %v183 = vand.u32 %v182, 4294901760
  %184 = vmatpush1.msra.mxu0 %v183
  %185 = vmatprep.subr.mxu0 0.0
  %v186 = vand.u32 %v24, 4294901760
  %v187 = vsub.f32 %v24, %v186
  %v188 = vand.u32 %v187, 4294901760
  %v189 = vsub.f32 %v187, %v188
  %v190 = vand.u32 %v189, 4294901760
  %191 = vmatpush1.msra.mxu0 %v190
  %192 = vmatprep.subr.mxu0 0.0
  %v193 = vand.u32 %v23, 4294901760
  %v194 = vsub.f32 %v23, %v193
  %v195 = vand.u32 %v194, 4294901760
  %v196 = vsub.f32 %v194, %v195
  %v197 = vand.u32 %v196, 4294901760
  %198 = vmatpush1.msra.mxu0 %v197
  %199 = vmatprep.subr.mxu0 0.0
  %v200 = vand.u32 %v22, 4294901760
  %v201 = vsub.f32 %v22, %v200
  %v202 = vand.u32 %v201, 4294901760
  %v203 = vsub.f32 %v201, %v202
  %v204 = vand.u32 %v203, 4294901760
  %205 = vmatpush1.msra.mxu0 %v204
  %206 = vmatprep.subr.mxu0 0.0
  %v207 = vand.u32 %v21, 4294901760
  %v208 = vsub.f32 %v21, %v207
  %v209 = vand.u32 %v208, 4294901760
  %v210 = vsub.f32 %v208, %v209
  %v211 = vand.u32 %v210, 4294901760
  %212 = vmatpush1.msra.mxu0 %v211
  %213 = vmatprep.subr.mxu0 0.0
  %v214 = vand.u32 %v20, 4294901760
  %v215 = vsub.f32 %v20, %v214
  %v216 = vand.u32 %v215, 4294901760
  %v217 = vsub.f32 %v215, %v216
  %v218 = vand.u32 %v217, 4294901760
  %219 = vmatpush1.msra.mxu0 %v218
  %220 = vmatprep.subr.mxu0 0.0
  %v221 = vand.u32 %v19, 4294901760
  %v222 = vsub.f32 %v19, %v221
  %v223 = vand.u32 %v222, 4294901760
  %v224 = vsub.f32 %v222, %v223
  %v225 = vand.u32 %v224, 4294901760
  %226 = vmatpush1.msra.mxu0 %v225
  %227 = vmatprep.subr.mxu0 0.0
  %v228 = vand.u32 %v18, 4294901760
  %v229 = vsub.f32 %v18, %v228
  %v230 = vand.u32 %v229, 4294901760
  %v231 = vsub.f32 %v229, %v230
  %v232 = vand.u32 %v231, 4294901760
  %233 = vmatpush1.msra.mxu0 %v232
  %234 = vmatprep.subr.mxu0 0.0
  %v235 = vand.u32 %v17, 4294901760
  %v236 = vsub.f32 %v17, %v235
  %v237 = vand.u32 %v236, 4294901760
  %v238 = vsub.f32 %v236, %v237
  %v239 = vand.u32 %v238, 4294901760
  %240 = vmatpush1.msra.mxu0 %v239
  %241 = vmatprep.subr.mxu0 0.0
  %v242 = vand.u32 %v16, 4294901760
  %v243 = vsub.f32 %v16, %v242
  %v244 = vand.u32 %v243, 4294901760
  %v245 = vsub.f32 %v243, %v244
  %v246 = vand.u32 %v245, 4294901760
  %247 = vmatpush1.msra.mxu0 %v246
  %248 = vmatprep.subr.mxu0 0.0
  %v249 = vand.u32 %v15, 4294901760
  %v250 = vsub.f32 %v15, %v249
  %v251 = vand.u32 %v250, 4294901760
  %v252 = vsub.f32 %v250, %v251
  %v253 = vand.u32 %v252, 4294901760
  %254 = vmatpush1.msra.mxu0 %v253
  %255 = vmatprep.subr.mxu0 0.0
  %v256 = vand.u32 %v14, 4294901760
  %v257 = vsub.f32 %v14, %v256
  %v258 = vand.u32 %v257, 4294901760
  %v259 = vsub.f32 %v257, %v258
  %v260 = vand.u32 %v259, 4294901760
  %261 = vmatpush1.msra.mxu0 %v260
  %262 = vmatprep.subr.mxu0 0.0
  %v263 = vand.u32 %v13, 4294901760
  %v264 = vsub.f32 %v13, %v263
  %v265 = vand.u32 %v264, 4294901760
  %v266 = vsub.f32 %v264, %v265
  %v267 = vand.u32 %v266, 4294901760
  %268 = vmatpush1.msra.mxu0 %v267
  %269 = vmatprep.subr.mxu0 0.0
  %v270 = vand.u32 %v44, 4294901760
  %v271 = vsub.f32 %v44, %v270
  %v272 = vand.u32 %v271, 4294901760
  %v273 = vsub.f32 %v271, %v272
  %v274 = vand.u32 %v273, 4294901760
  %275 = vmatpush2.msra.mxu0 %v274
  %276 = vmatprep.subr.mxu0 0.0
  %v277 = vand.u32 %v43, 4294901760
  %v278 = vsub.f32 %v43, %v277
  %v279 = vand.u32 %v278, 4294901760
  %v280 = vsub.f32 %v278, %v279
  %v281 = vand.u32 %v280, 4294901760
  %282 = vmatpush2.msra.mxu0 %v281
  %283 = vmatprep.subr.mxu0 0.0
  %v284 = vand.u32 %v42, 4294901760
  %v285 = vsub.f32 %v42, %v284
  %v286 = vand.u32 %v285, 4294901760
  %v287 = vsub.f32 %v285, %v286
  %v288 = vand.u32 %v287, 4294901760
  %289 = vmatpush2.msra.mxu0 %v288
  %290 = vmatprep.subr.mxu0 0.0
  %v291 = vand.u32 %v41, 4294901760
  %v292 = vsub.f32 %v41, %v291
  %v293 = vand.u32 %v292, 4294901760
  %v294 = vsub.f32 %v292, %v293
  %v295 = vand.u32 %v294, 4294901760
  %296 = vmatpush2.msra.mxu0 %v295
  %297 = vmatprep.subr.mxu0 0.0
  %v298 = vand.u32 %v40, 4294901760
  %v299 = vsub.f32 %v40, %v298
  %v300 = vand.u32 %v299, 4294901760
  %v301 = vsub.f32 %v299, %v300
  %v302 = vand.u32 %v301, 4294901760
  %303 = vmatpush2.msra.mxu0 %v302
  %304 = vmatprep.subr.mxu0 0.0
  %v305 = vand.u32 %v39, 4294901760
  %v306 = vsub.f32 %v39, %v305
  %v307 = vand.u32 %v306, 4294901760
  %v308 = vsub.f32 %v306, %v307
  %v309 = vand.u32 %v308, 4294901760
  %310 = vmatpush2.msra.mxu0 %v309
  %311 = vmatprep.subr.mxu0 0.0
  %v312 = vand.u32 %v38, 4294901760
  %v313 = vsub.f32 %v38, %v312
  %v314 = vand.u32 %v313, 4294901760
  %v315 = vsub.f32 %v313, %v314
  %v316 = vand.u32 %v315, 4294901760
  %317 = vmatpush2.msra.mxu0 %v316
  %318 = vmatprep.subr.mxu0 0.0
  %v319 = vand.u32 %v37, 4294901760
  %v320 = vsub.f32 %v37, %v319
  %v321 = vand.u32 %v320, 4294901760
  %v322 = vsub.f32 %v320, %v321
  %v323 = vand.u32 %v322, 4294901760
  %324 = vmatpush2.msra.mxu0 %v323
  %325 = vmatprep.subr.mxu0 0.0
  %v326 = vand.u32 %v36, 4294901760
  %v327 = vsub.f32 %v36, %v326
  %v328 = vand.u32 %v327, 4294901760
  %v329 = vsub.f32 %v327, %v328
  %v330 = vand.u32 %v329, 4294901760
  %331 = vmatpush2.msra.mxu0 %v330
  %332 = vmatprep.subr.mxu0 0.0
  %v333 = vand.u32 %v35, 4294901760
  %v334 = vsub.f32 %v35, %v333
  %v335 = vand.u32 %v334, 4294901760
  %v336 = vsub.f32 %v334, %v335
  %v337 = vand.u32 %v336, 4294901760
  %338 = vmatpush2.msra.mxu0 %v337
  %339 = vmatprep.subr.mxu0 0.0
  %v340 = vand.u32 %v34, 4294901760
  %v341 = vsub.f32 %v34, %v340
  %v342 = vand.u32 %v341, 4294901760
  %v343 = vsub.f32 %v341, %v342
  %v344 = vand.u32 %v343, 4294901760
  %345 = vmatpush2.msra.mxu0 %v344
  %346 = vmatprep.subr.mxu0 0.0
  %v347 = vand.u32 %v33, 4294901760
  %v348 = vsub.f32 %v33, %v347
  %v349 = vand.u32 %v348, 4294901760
  %v350 = vsub.f32 %v348, %v349
  %v351 = vand.u32 %v350, 4294901760
  %352 = vmatpush2.msra.mxu0 %v351
  %353 = vmatprep.subr.mxu0 0.0
  %v354 = vand.u32 %v32, 4294901760
  %v355 = vsub.f32 %v32, %v354
  %v356 = vand.u32 %v355, 4294901760
  %v357 = vsub.f32 %v355, %v356
  %v358 = vand.u32 %v357, 4294901760
  %359 = vmatpush2.msra.mxu0 %v358
  %360 = vmatprep.subr.mxu0 0.0
  %v361 = vand.u32 %v31, 4294901760
  %v362 = vsub.f32 %v31, %v361
  %v363 = vand.u32 %v362, 4294901760
  %v364 = vsub.f32 %v362, %v363
  %v365 = vand.u32 %v364, 4294901760
  %366 = vmatpush2.msra.mxu0 %v365
  %367 = vmatprep.subr.mxu0 0.0
  %v368 = vand.u32 %v30, 4294901760
  %v369 = vsub.f32 %v30, %v368
  %v370 = vand.u32 %v369, 4294901760
  %v371 = vsub.f32 %v369, %v370
  %v372 = vand.u32 %v371, 4294901760
  %373 = vmatpush2.msra.mxu0 %v372
  %374 = vmatprep.subr.mxu0 0.0
  %v375 = vand.u32 %v29, 4294901760
  %v376 = vsub.f32 %v29, %v375
  %v377 = vand.u32 %v376, 4294901760
  %v378 = vsub.f32 %v376, %v377
  %v379 = vand.u32 %v378, 4294901760
  %380 = vmatpush2.msra.mxu0 %v379
  %v381 = vand.u32 %v12, 4294901760
  %382 = vmatprep.mubr.f32.mxu0 %v381
  %v383 = vand.u32 %v11, 4294901760
  %384 = vmatmul.mubr.f32.gmra.mxu0 %v383
  %v385 = vpop.f32.mrf.mxu0
  %v386 = vadd.f32 %v154, %v385
  %v387 = vpop.f32.mrf.mxu0
  %388 = vdwg.mxu0
  %389 = vmatprep.subr.mxu0 0.0
  %v390 = vand.u32 %v28, 4294901760
  %v391 = vsub.f32 %v28, %v390
  %392 = vmatpush1.msra.mxu0 %v391
  %393 = vmatprep.subr.mxu0 0.0
  %v394 = vand.u32 %v27, 4294901760
  %v395 = vsub.f32 %v27, %v394
  %396 = vmatpush1.msra.mxu0 %v395
  %397 = vmatprep.subr.mxu0 0.0
  %v398 = vand.u32 %v26, 4294901760
  %v399 = vsub.f32 %v26, %v398
  %400 = vmatpush1.msra.mxu0 %v399
  %401 = vmatprep.subr.mxu0 0.0
  %v402 = vand.u32 %v25, 4294901760
  %v403 = vsub.f32 %v25, %v402
  %404 = vmatpush1.msra.mxu0 %v403
  %405 = vmatprep.subr.mxu0 0.0
  %v406 = vand.u32 %v24, 4294901760
  %v407 = vsub.f32 %v24, %v406
  %408 = vmatpush1.msra.mxu0 %v407
  %409 = vmatprep.subr.mxu0 0.0
  %v410 = vand.u32 %v23, 4294901760
  %v411 = vsub.f32 %v23, %v410
  %412 = vmatpush1.msra.mxu0 %v411
  %413 = vmatprep.subr.mxu0 0.0
  %v414 = vand.u32 %v22, 4294901760
  %v415 = vsub.f32 %v22, %v414
  %416 = vmatpush1.msra.mxu0 %v415
  %417 = vmatprep.subr.mxu0 0.0
  %v418 = vand.u32 %v21, 4294901760
  %v419 = vsub.f32 %v21, %v418
  %420 = vmatpush1.msra.mxu0 %v419
  %421 = vmatprep.subr.mxu0 0.0
  %v422 = vand.u32 %v20, 4294901760
  %v423 = vsub.f32 %v20, %v422
  %424 = vmatpush1.msra.mxu0 %v423
  %425 = vmatprep.subr.mxu0 0.0
  %v426 = vand.u32 %v19, 4294901760
  %v427 = vsub.f32 %v19, %v426
  %428 = vmatpush1.msra.mxu0 %v427
  %429 = vmatprep.subr.mxu0 0.0
  %v430 = vand.u32 %v18, 4294901760
  %v431 = vsub.f32 %v18, %v430
  %432 = vmatpush1.msra.mxu0 %v431
  %433 = vmatprep.subr.mxu0 0.0
  %v434 = vand.u32 %v17, 4294901760
  %v435 = vsub.f32 %v17, %v434
  %436 = vmatpush1.msra.mxu0 %v435
  %437 = vmatprep.subr.mxu0 0.0
  %v438 = vand.u32 %v16, 4294901760
  %v439 = vsub.f32 %v16, %v438
  %440 = vmatpush1.msra.mxu0 %v439
  %441 = vmatprep.subr.mxu0 0.0
  %v442 = vand.u32 %v15, 4294901760
  %v443 = vsub.f32 %v15, %v442
  %444 = vmatpush1.msra.mxu0 %v443
  %445 = vmatprep.subr.mxu0 0.0
  %v446 = vand.u32 %v14, 4294901760
  %v447 = vsub.f32 %v14, %v446
  %448 = vmatpush1.msra.mxu0 %v447
  %449 = vmatprep.subr.mxu0 0.0
  %v450 = vand.u32 %v13, 4294901760
  %v451 = vsub.f32 %v13, %v450
  %452 = vmatpush1.msra.mxu0 %v451
  %453 = vmatprep.subr.mxu0 0.0
  %v454 = vand.u32 %v44, 4294901760
  %v455 = vsub.f32 %v44, %v454
  %456 = vmatpush2.msra.mxu0 %v455
  %457 = vmatprep.subr.mxu0 0.0
  %v458 = vand.u32 %v43, 4294901760
  %v459 = vsub.f32 %v43, %v458
  %460 = vmatpush2.msra.mxu0 %v459
  %461 = vmatprep.subr.mxu0 0.0
  %v462 = vand.u32 %v42, 4294901760
  %v463 = vsub.f32 %v42, %v462
  %464 = vmatpush2.msra.mxu0 %v463
  %465 = vmatprep.subr.mxu0 0.0
  %v466 = vand.u32 %v41, 4294901760
  %v467 = vsub.f32 %v41, %v466
  %468 = vmatpush2.msra.mxu0 %v467
  %469 = vmatprep.subr.mxu0 0.0
  %v470 = vand.u32 %v40, 4294901760
  %v471 = vsub.f32 %v40, %v470
  %472 = vmatpush2.msra.mxu0 %v471
  %473 = vmatprep.subr.mxu0 0.0
  %v474 = vand.u32 %v39, 4294901760
  %v475 = vsub.f32 %v39, %v474
  %476 = vmatpush2.msra.mxu0 %v475
  %477 = vmatprep.subr.mxu0 0.0
  %v478 = vand.u32 %v38, 4294901760
  %v479 = vsub.f32 %v38, %v478
  %480 = vmatpush2.msra.mxu0 %v479
  %481 = vmatprep.subr.mxu0 0.0
  %v482 = vand.u32 %v37, 4294901760
  %v483 = vsub.f32 %v37, %v482
  %484 = vmatpush2.msra.mxu0 %v483
  %485 = vmatprep.subr.mxu0 0.0
  %v486 = vand.u32 %v36, 4294901760
  %v487 = vsub.f32 %v36, %v486
  %488 = vmatpush2.msra.mxu0 %v487
  %489 = vmatprep.subr.mxu0 0.0
  %v490 = vand.u32 %v35, 4294901760
  %v491 = vsub.f32 %v35, %v490
  %492 = vmatpush2.msra.mxu0 %v491
  %493 = vmatprep.subr.mxu0 0.0
  %v494 = vand.u32 %v34, 4294901760
  %v495 = vsub.f32 %v34, %v494
  %496 = vmatpush2.msra.mxu0 %v495
  %497 = vmatprep.subr.mxu0 0.0
  %v498 = vand.u32 %v33, 4294901760
  %v499 = vsub.f32 %v33, %v498
  %500 = vmatpush2.msra.mxu0 %v499
  %501 = vmatprep.subr.mxu0 0.0
  %v502 = vand.u32 %v32, 4294901760
  %v503 = vsub.f32 %v32, %v502
  %504 = vmatpush2.msra.mxu0 %v503
  %505 = vmatprep.subr.mxu0 0.0
  %v506 = vand.u32 %v31, 4294901760
  %v507 = vsub.f32 %v31, %v506
  %508 = vmatpush2.msra.mxu0 %v507
  %509 = vmatprep.subr.mxu0 0.0
  %v510 = vand.u32 %v30, 4294901760
  %v511 = vsub.f32 %v30, %v510
  %512 = vmatpush2.msra.mxu0 %v511
  %513 = vmatprep.subr.mxu0 0.0
  %v514 = vand.u32 %v29, 4294901760
  %v515 = vsub.f32 %v29, %v514
  %516 = vmatpush2.msra.mxu0 %v515
  %v517 = vand.u32 %v12, 4294901760
  %v518 = vsub.f32 %v12, %v517
  %519 = vmatprep.mubr.f32.mxu0 %v518
  %v520 = vand.u32 %v11, 4294901760
  %v521 = vsub.f32 %v11, %v520
  %522 = vmatmul.mubr.f32.gmra.mxu0 %v521
  %v523 = vpop.f32.mrf.mxu0
  %v524 = vadd.f32 %v386, %v523
  %v525 = vpop.f32.mrf.mxu0
  %526 = vdwg.mxu0
  %527 = vmatprep.subr.mxu0 0.0
  %v528 = vand.u32 %v28, 4294901760
  %529 = vmatpush1.msra.mxu0 %v528
  %530 = vmatprep.subr.mxu0 0.0
  %v531 = vand.u32 %v27, 4294901760
  %532 = vmatpush1.msra.mxu0 %v531
  %533 = vmatprep.subr.mxu0 0.0
  %v534 = vand.u32 %v26, 4294901760
  %535 = vmatpush1.msra.mxu0 %v534
  %536 = vmatprep.subr.mxu0 0.0
  %v537 = vand.u32 %v25, 4294901760
  %538 = vmatpush1.msra.mxu0 %v537
  %539 = vmatprep.subr.mxu0 0.0
  %v540 = vand.u32 %v24, 4294901760
  %541 = vmatpush1.msra.mxu0 %v540
  %542 = vmatprep.subr.mxu0 0.0
  %v543 = vand.u32 %v23, 4294901760
  %544 = vmatpush1.msra.mxu0 %v543
  %545 = vmatprep.subr.mxu0 0.0
  %v546 = vand.u32 %v22, 4294901760
  %547 = vmatpush1.msra.mxu0 %v546
  %548 = vmatprep.subr.mxu0 0.0
  %v549 = vand.u32 %v21, 4294901760
  %550 = vmatpush1.msra.mxu0 %v549
  %551 = vmatprep.subr.mxu0 0.0
  %v552 = vand.u32 %v20, 4294901760
  %553 = vmatpush1.msra.mxu0 %v552
  %554 = vmatprep.subr.mxu0 0.0
  %v555 = vand.u32 %v19, 4294901760
  %556 = vmatpush1.msra.mxu0 %v555
  %557 = vmatprep.subr.mxu0 0.0
  %v558 = vand.u32 %v18, 4294901760
  %559 = vmatpush1.msra.mxu0 %v558
  %560 = vmatprep.subr.mxu0 0.0
  %v561 = vand.u32 %v17, 4294901760
  %562 = vmatpush1.msra.mxu0 %v561
  %563 = vmatprep.subr.mxu0 0.0
  %v564 = vand.u32 %v16, 4294901760
  %565 = vmatpush1.msra.mxu0 %v564
  %566 = vmatprep.subr.mxu0 0.0
  %v567 = vand.u32 %v15, 4294901760
  %568 = vmatpush1.msra.mxu0 %v567
  %569 = vmatprep.subr.mxu0 0.0
  %v570 = vand.u32 %v14, 4294901760
  %571 = vmatpush1.msra.mxu0 %v570
  %572 = vmatprep.subr.mxu0 0.0
  %v573 = vand.u32 %v13, 4294901760
  %574 = vmatpush1.msra.mxu0 %v573
  %575 = vmatprep.subr.mxu0 0.0
  %v576 = vand.u32 %v44, 4294901760
  %577 = vmatpush2.msra.mxu0 %v576
  %578 = vmatprep.subr.mxu0 0.0
  %v579 = vand.u32 %v43, 4294901760
  %580 = vmatpush2.msra.mxu0 %v579
  %581 = vmatprep.subr.mxu0 0.0
  %v582 = vand.u32 %v42, 4294901760
  %583 = vmatpush2.msra.mxu0 %v582
  %584 = vmatprep.subr.mxu0 0.0
  %v585 = vand.u32 %v41, 4294901760
  %586 = vmatpush2.msra.mxu0 %v585
  %587 = vmatprep.subr.mxu0 0.0
  %v588 = vand.u32 %v40, 4294901760
  %589 = vmatpush2.msra.mxu0 %v588
  %590 = vmatprep.subr.mxu0 0.0
  %v591 = vand.u32 %v39, 4294901760
  %592 = vmatpush2.msra.mxu0 %v591
  %593 = vmatprep.subr.mxu0 0.0
  %v594 = vand.u32 %v38, 4294901760
  %595 = vmatpush2.msra.mxu0 %v594
  %596 = vmatprep.subr.mxu0 0.0
  %v597 = vand.u32 %v37, 4294901760
  %598 = vmatpush2.msra.mxu0 %v597
  %599 = vmatprep.subr.mxu0 0.0
  %v600 = vand.u32 %v36, 4294901760
  %601 = vmatpush2.msra.mxu0 %v600
  %602 = vmatprep.subr.mxu0 0.0
  %v603 = vand.u32 %v35, 4294901760
  %604 = vmatpush2.msra.mxu0 %v603
  %605 = vmatprep.subr.mxu0 0.0
  %v606 = vand.u32 %v34, 4294901760
  %607 = vmatpush2.msra.mxu0 %v606
  %608 = vmatprep.subr.mxu0 0.0
  %v609 = vand.u32 %v33, 4294901760
  %610 = vmatpush2.msra.mxu0 %v609
  %611 = vmatprep.subr.mxu0 0.0
  %v612 = vand.u32 %v32, 4294901760
  %613 = vmatpush2.msra.mxu0 %v612
  %614 = vmatprep.subr.mxu0 0.0
  %v615 = vand.u32 %v31, 4294901760
  %616 = vmatpush2.msra.mxu0 %v615
  %617 = vmatprep.subr.mxu0 0.0
  %v618 = vand.u32 %v30, 4294901760
  %619 = vmatpush2.msra.mxu0 %v618
  %620 = vmatprep.subr.mxu0 0.0
  %v621 = vand.u32 %v29, 4294901760
  %622 = vmatpush2.msra.mxu0 %v621
  %v623 = vand.u32 %v12, 4294901760
  %v624 = vsub.f32 %v12, %v623
  %v625 = vand.u32 %v624, 4294901760
  %626 = vmatprep.mubr.f32.mxu0 %v625
  %v627 = vand.u32 %v11, 4294901760
  %v628 = vsub.f32 %v11, %v627
  %v629 = vand.u32 %v628, 4294901760
  %630 = vmatmul.mubr.f32.gmra.mxu0 %v629
  %v631 = vpop.f32.mrf.mxu0
  %v632 = vadd.f32 %v524, %v631
  %v633 = vpop.f32.mrf.mxu0
  %634 = vdwg.mxu0
  %635 = vmatprep.subr.mxu0 0.0
  %v636 = vand.u32 %v28, 4294901760
  %v637 = vsub.f32 %v28, %v636
  %v638 = vand.u32 %v637, 4294901760
  %639 = vmatpush1.msra.mxu0 %v638
  %640 = vmatprep.subr.mxu0 0.0
  %v641 = vand.u32 %v27, 4294901760
  %v642 = vsub.f32 %v27, %v641
  %v643 = vand.u32 %v642, 4294901760
  %644 = vmatpush1.msra.mxu0 %v643
  %645 = vmatprep.subr.mxu0 0.0
  %v646 = vand.u32 %v26, 4294901760
  %v647 = vsub.f32 %v26, %v646
  %v648 = vand.u32 %v647, 4294901760
  %649 = vmatpush1.msra.mxu0 %v648
  %650 = vmatprep.subr.mxu0 0.0
  %v651 = vand.u32 %v25, 4294901760
  %v652 = vsub.f32 %v25, %v651
  %v653 = vand.u32 %v652, 4294901760
  %654 = vmatpush1.msra.mxu0 %v653
  %655 = vmatprep.subr.mxu0 0.0
  %v656 = vand.u32 %v24, 4294901760
  %v657 = vsub.f32 %v24, %v656
  %v658 = vand.u32 %v657, 4294901760
  %659 = vmatpush1.msra.mxu0 %v658
  %660 = vmatprep.subr.mxu0 0.0
  %v661 = vand.u32 %v23, 4294901760
  %v662 = vsub.f32 %v23, %v661
  %v663 = vand.u32 %v662, 4294901760
  %664 = vmatpush1.msra.mxu0 %v663
  %665 = vmatprep.subr.mxu0 0.0
  %v666 = vand.u32 %v22, 4294901760
  %v667 = vsub.f32 %v22, %v666
  %v668 = vand.u32 %v667, 4294901760
  %669 = vmatpush1.msra.mxu0 %v668
  %670 = vmatprep.subr.mxu0 0.0
  %v671 = vand.u32 %v21, 4294901760
  %v672 = vsub.f32 %v21, %v671
  %v673 = vand.u32 %v672, 4294901760
  %674 = vmatpush1.msra.mxu0 %v673
  %675 = vmatprep.subr.mxu0 0.0
  %v676 = vand.u32 %v20, 4294901760
  %v677 = vsub.f32 %v20, %v676
  %v678 = vand.u32 %v677, 4294901760
  %679 = vmatpush1.msra.mxu0 %v678
  %680 = vmatprep.subr.mxu0 0.0
  %v681 = vand.u32 %v19, 4294901760
  %v682 = vsub.f32 %v19, %v681
  %v683 = vand.u32 %v682, 4294901760
  %684 = vmatpush1.msra.mxu0 %v683
  %685 = vmatprep.subr.mxu0 0.0
  %v686 = vand.u32 %v18, 4294901760
  %v687 = vsub.f32 %v18, %v686
  %v688 = vand.u32 %v687, 4294901760
  %689 = vmatpush1.msra.mxu0 %v688
  %690 = vmatprep.subr.mxu0 0.0
  %v691 = vand.u32 %v17, 4294901760
  %v692 = vsub.f32 %v17, %v691
  %v693 = vand.u32 %v692, 4294901760
  %694 = vmatpush1.msra.mxu0 %v693
  %695 = vmatprep.subr.mxu0 0.0
  %v696 = vand.u32 %v16, 4294901760
  %v697 = vsub.f32 %v16, %v696
  %v698 = vand.u32 %v697, 4294901760
  %699 = vmatpush1.msra.mxu0 %v698
  %700 = vmatprep.subr.mxu0 0.0
  %v701 = vand.u32 %v15, 4294901760
  %v702 = vsub.f32 %v15, %v701
  %v703 = vand.u32 %v702, 4294901760
  %704 = vmatpush1.msra.mxu0 %v703
  %705 = vmatprep.subr.mxu0 0.0
  %v706 = vand.u32 %v14, 4294901760
  %v707 = vsub.f32 %v14, %v706
  %v708 = vand.u32 %v707, 4294901760
  %709 = vmatpush1.msra.mxu0 %v708
  %710 = vmatprep.subr.mxu0 0.0
  %v711 = vand.u32 %v13, 4294901760
  %v712 = vsub.f32 %v13, %v711
  %v713 = vand.u32 %v712, 4294901760
  %714 = vmatpush1.msra.mxu0 %v713
  %715 = vmatprep.subr.mxu0 0.0
  %v716 = vand.u32 %v44, 4294901760
  %v717 = vsub.f32 %v44, %v716
  %v718 = vand.u32 %v717, 4294901760
  %719 = vmatpush2.msra.mxu0 %v718
  %720 = vmatprep.subr.mxu0 0.0
  %v721 = vand.u32 %v43, 4294901760
  %v722 = vsub.f32 %v43, %v721
  %v723 = vand.u32 %v722, 4294901760
  %724 = vmatpush2.msra.mxu0 %v723
  %725 = vmatprep.subr.mxu0 0.0
  %v726 = vand.u32 %v42, 4294901760
  %v727 = vsub.f32 %v42, %v726
  %v728 = vand.u32 %v727, 4294901760
  %729 = vmatpush2.msra.mxu0 %v728
  %730 = vmatprep.subr.mxu0 0.0
  %v731 = vand.u32 %v41, 4294901760
  %v732 = vsub.f32 %v41, %v731
  %v733 = vand.u32 %v732, 4294901760
  %734 = vmatpush2.msra.mxu0 %v733
  %735 = vmatprep.subr.mxu0 0.0
  %v736 = vand.u32 %v40, 4294901760
  %v737 = vsub.f32 %v40, %v736
  %v738 = vand.u32 %v737, 4294901760
  %739 = vmatpush2.msra.mxu0 %v738
  %740 = vmatprep.subr.mxu0 0.0
  %v741 = vand.u32 %v39, 4294901760
  %v742 = vsub.f32 %v39, %v741
  %v743 = vand.u32 %v742, 4294901760
  %744 = vmatpush2.msra.mxu0 %v743
  %745 = vmatprep.subr.mxu0 0.0
  %v746 = vand.u32 %v38, 4294901760
  %v747 = vsub.f32 %v38, %v746
  %v748 = vand.u32 %v747, 4294901760
  %749 = vmatpush2.msra.mxu0 %v748
  %750 = vmatprep.subr.mxu0 0.0
  %v751 = vand.u32 %v37, 4294901760
  %v752 = vsub.f32 %v37, %v751
  %v753 = vand.u32 %v752, 4294901760
  %754 = vmatpush2.msra.mxu0 %v753
  %755 = vmatprep.subr.mxu0 0.0
  %v756 = vand.u32 %v36, 4294901760
  %v757 = vsub.f32 %v36, %v756
  %v758 = vand.u32 %v757, 4294901760
  %759 = vmatpush2.msra.mxu0 %v758
  %760 = vmatprep.subr.mxu0 0.0
  %v761 = vand.u32 %v35, 4294901760
  %v762 = vsub.f32 %v35, %v761
  %v763 = vand.u32 %v762, 4294901760
  %764 = vmatpush2.msra.mxu0 %v763
  %765 = vmatprep.subr.mxu0 0.0
  %v766 = vand.u32 %v34, 4294901760
  %v767 = vsub.f32 %v34, %v766
  %v768 = vand.u32 %v767, 4294901760
  %769 = vmatpush2.msra.mxu0 %v768
  %770 = vmatprep.subr.mxu0 0.0
  %v771 = vand.u32 %v33, 4294901760
  %v772 = vsub.f32 %v33, %v771
  %v773 = vand.u32 %v772, 4294901760
  %774 = vmatpush2.msra.mxu0 %v773
  %775 = vmatprep.subr.mxu0 0.0
  %v776 = vand.u32 %v32, 4294901760
  %v777 = vsub.f32 %v32, %v776
  %v778 = vand.u32 %v777, 4294901760
  %779 = vmatpush2.msra.mxu0 %v778
  %780 = vmatprep.subr.mxu0 0.0
  %v781 = vand.u32 %v31, 4294901760
  %v782 = vsub.f32 %v31, %v781
  %v783 = vand.u32 %v782, 4294901760
  %784 = vmatpush2.msra.mxu0 %v783
  %785 = vmatprep.subr.mxu0 0.0
  %v786 = vand.u32 %v30, 4294901760
  %v787 = vsub.f32 %v30, %v786
  %v788 = vand.u32 %v787, 4294901760
  %789 = vmatpush2.msra.mxu0 %v788
  %790 = vmatprep.subr.mxu0 0.0
  %v791 = vand.u32 %v29, 4294901760
  %v792 = vsub.f32 %v29, %v791
  %v793 = vand.u32 %v792, 4294901760
  %794 = vmatpush2.msra.mxu0 %v793
  %v795 = vand.u32 %v12, 4294901760
  %796 = vmatprep.mubr.f32.mxu0 %v795
  %v797 = vand.u32 %v11, 4294901760
  %798 = vmatmul.mubr.f32.gmra.mxu0 %v797
  %v799 = vpop.f32.mrf.mxu0
  %v800 = vadd.f32 %v632, %v799
  %v801 = vpop.f32.mrf.mxu0
  %802 = vdwg.mxu0
  %803 = vmatprep.subr.mxu0 0.0
  %v804 = vand.u32 %v28, 4294901760
  %805 = vmatpush1.msra.mxu0 %v804
  %806 = vmatprep.subr.mxu0 0.0
  %v807 = vand.u32 %v27, 4294901760
  %808 = vmatpush1.msra.mxu0 %v807
  %809 = vmatprep.subr.mxu0 0.0
  %v810 = vand.u32 %v26, 4294901760
  %811 = vmatpush1.msra.mxu0 %v810
  %812 = vmatprep.subr.mxu0 0.0
  %v813 = vand.u32 %v25, 4294901760
  %814 = vmatpush1.msra.mxu0 %v813
  %815 = vmatprep.subr.mxu0 0.0
  %v816 = vand.u32 %v24, 4294901760
  %817 = vmatpush1.msra.mxu0 %v816
  %818 = vmatprep.subr.mxu0 0.0
  %v819 = vand.u32 %v23, 4294901760
  %820 = vmatpush1.msra.mxu0 %v819
  %821 = vmatprep.subr.mxu0 0.0
  %v822 = vand.u32 %v22, 4294901760
  %823 = vmatpush1.msra.mxu0 %v822
  %824 = vmatprep.subr.mxu0 0.0
  %v825 = vand.u32 %v21, 4294901760
  %826 = vmatpush1.msra.mxu0 %v825
  %827 = vmatprep.subr.mxu0 0.0
  %v828 = vand.u32 %v20, 4294901760
  %829 = vmatpush1.msra.mxu0 %v828
  %830 = vmatprep.subr.mxu0 0.0
  %v831 = vand.u32 %v19, 4294901760
  %832 = vmatpush1.msra.mxu0 %v831
  %833 = vmatprep.subr.mxu0 0.0
  %v834 = vand.u32 %v18, 4294901760
  %835 = vmatpush1.msra.mxu0 %v834
  %836 = vmatprep.subr.mxu0 0.0
  %v837 = vand.u32 %v17, 4294901760
  %838 = vmatpush1.msra.mxu0 %v837
  %839 = vmatprep.subr.mxu0 0.0
  %v840 = vand.u32 %v16, 4294901760
  %841 = vmatpush1.msra.mxu0 %v840
  %842 = vmatprep.subr.mxu0 0.0
  %v843 = vand.u32 %v15, 4294901760
  %844 = vmatpush1.msra.mxu0 %v843
  %845 = vmatprep.subr.mxu0 0.0
  %v846 = vand.u32 %v14, 4294901760
  %847 = vmatpush1.msra.mxu0 %v846
  %848 = vmatprep.subr.mxu0 0.0
  %v849 = vand.u32 %v13, 4294901760
  %850 = vmatpush1.msra.mxu0 %v849
  %851 = vmatprep.subr.mxu0 0.0
  %v852 = vand.u32 %v44, 4294901760
  %853 = vmatpush2.msra.mxu0 %v852
  %854 = vmatprep.subr.mxu0 0.0
  %v855 = vand.u32 %v43, 4294901760
  %856 = vmatpush2.msra.mxu0 %v855
  %857 = vmatprep.subr.mxu0 0.0
  %v858 = vand.u32 %v42, 4294901760
  %859 = vmatpush2.msra.mxu0 %v858
  %860 = vmatprep.subr.mxu0 0.0
  %v861 = vand.u32 %v41, 4294901760
  %862 = vmatpush2.msra.mxu0 %v861
  %863 = vmatprep.subr.mxu0 0.0
  %v864 = vand.u32 %v40, 4294901760
  %865 = vmatpush2.msra.mxu0 %v864
  %866 = vmatprep.subr.mxu0 0.0
  %v867 = vand.u32 %v39, 4294901760
  %868 = vmatpush2.msra.mxu0 %v867
  %869 = vmatprep.subr.mxu0 0.0
  %v870 = vand.u32 %v38, 4294901760
  %871 = vmatpush2.msra.mxu0 %v870
  %872 = vmatprep.subr.mxu0 0.0
  %v873 = vand.u32 %v37, 4294901760
  %874 = vmatpush2.msra.mxu0 %v873
  %875 = vmatprep.subr.mxu0 0.0
  %v876 = vand.u32 %v36, 4294901760
  %877 = vmatpush2.msra.mxu0 %v876
  %878 = vmatprep.subr.mxu0 0.0
  %v879 = vand.u32 %v35, 4294901760
  %880 = vmatpush2.msra.mxu0 %v879
  %881 = vmatprep.subr.mxu0 0.0
  %v882 = vand.u32 %v34, 4294901760
  %883 = vmatpush2.msra.mxu0 %v882
  %884 = vmatprep.subr.mxu0 0.0
  %v885 = vand.u32 %v33, 4294901760
  %886 = vmatpush2.msra.mxu0 %v885
  %887 = vmatprep.subr.mxu0 0.0
  %v888 = vand.u32 %v32, 4294901760
  %889 = vmatpush2.msra.mxu0 %v888
  %890 = vmatprep.subr.mxu0 0.0
  %v891 = vand.u32 %v31, 4294901760
  %892 = vmatpush2.msra.mxu0 %v891
  %893 = vmatprep.subr.mxu0 0.0
  %v894 = vand.u32 %v30, 4294901760
  %895 = vmatpush2.msra.mxu0 %v894
  %896 = vmatprep.subr.mxu0 0.0
  %v897 = vand.u32 %v29, 4294901760
  %898 = vmatpush2.msra.mxu0 %v897
  %v899 = vand.u32 %v12, 4294901760
  %900 = vmatprep.mubr.f32.mxu0 %v899
  %v901 = vand.u32 %v11, 4294901760
  %902 = vmatmul.mubr.f32.gmra.mxu0 %v901
  %v903 = vpop.f32.mrf.mxu0
  %v904 = vadd.f32 %v800, %v903
  %v905 = vpop.f32.mrf.mxu0
  %906 = vdwg.mxu0
  %v907 = vmul.f32 %v904, 0.0625
  %vm908 = vcmask 130048
  %909 = vst.msk [vmem:[%s2] sm:$0xff] %vm908, %v907
  // Predicated region
  $region10: #{stat_pool_layer.1} parent=0 // pred_check
    _
  $region11: #{stat_pool_layer.1} parent=0 // pred_check_branch
    %911 = sbr.rel (0) target = $region13
  $region12: #{stat_pool_layer.1} parent=0 // pred_region
    _
  $region13: #{stat_pool_layer.1} parent=0 // pred_fallthru
    _
  // Predicated region
  $region14: #{stat_pool_layer.1} parent=0 // pred_check
    _
  $region15: #{stat_pool_layer.1} parent=0 // pred_check_branch
    %913 = sbr.rel (0) target = $region17
  $region16: #{stat_pool_layer.1} parent=0 // pred_region
    _
  $region17: #{stat_pool_layer.1} parent=0 // pred_fallthru
    _

</llo_original>
